<compile_context>
chip_gen: v7x
topology: tpu7x:2x2x1
jax: 0.10.0
libtpu: 0.0.40
codegen_flags: <defaults>
</compile_context>

<pallas_src>
import jax
import jax.numpy as jnp
from jax.experimental import pallas as pl
from jax.experimental.pallas import tpu as pltpu

SHOT_NUM = 8
SIM_CHANNEL = 128
_EPS = 1e-8  # F.cosine_similarity default eps


def _cos_sim_kernel(x_ref, w_ref, b_ref, out_ref):
    # x_ref  : (TILE_B, 2K)   rows are [p1 | p2]
    # w_ref  : (2K, 256)      block-diagonal [[W^T, 0], [0, W^T]]
    # b_ref  : (1, 256)       [bias | bias]
    # out_ref: (TILE_B, 1)
    v = jnp.dot(x_ref[...], w_ref[...],
                preferred_element_type=jnp.float32) + b_ref[...]
    v1 = v[:, :SIM_CHANNEL]          # free per-vreg lane split at 128
    v2 = v[:, SIM_CHANNEL:]

    num = jnp.sum(v1 * v2, axis=-1, keepdims=True)
    n1sq = jnp.sum(v1 * v1, axis=-1, keepdims=True)
    n2sq = jnp.sum(v2 * v2, axis=-1, keepdims=True)

    # max(sqrt(n1sq), eps) * max(sqrt(n2sq), eps) == sqrt(max(n1sq,eps^2)*max(n2sq,eps^2))
    eps_sq = jnp.float32(_EPS * _EPS)
    denom_sq = jnp.maximum(n1sq, eps_sq) * jnp.maximum(n2sq, eps_sq)
    out_ref[...] = num * jax.lax.rsqrt(denom_sq)   # single EUP rsqrt


def _round_up(n, m):
    return (n + m - 1) // m * m


def cos_sim_block(x, weight, bias, *, tile_b=1024):
    """x: (B, S=8, D) f32; weight: (SIM_CHANNEL, 4*D) (PyTorch layout); bias: (SIM_CHANNEL,)."""
    B, S, D = x.shape
    assert S == SHOT_NUM
    half = SHOT_NUM // 2
    K = half * D
    K2 = 2 * K                     # = S * D
    N2 = 2 * SIM_CHANNEL

    # Layout-preserving flatten: rows are already [p1 | p2]; no HBM copies.
    x2 = x.reshape(B, K2)

    # Batch tiling: pad B up to a multiple of the tile (padded rows are zeros;
    # they produce finite cosine values and are sliced off below).
    tile_b = min(tile_b, _round_up(B, 8))
    b_pad = _round_up(B, tile_b)
    if b_pad != B:
        x2 = jnp.pad(x2, ((0, b_pad - B), (0, 0)))

    # Block-diagonal weight (2K, 256) and doubled bias (1, 256), built once
    # in the wrapper (tiny: 8*K*SIM_CHANNEL*4 bytes).
    w_t = weight.T.astype(jnp.float32)             # (K, 128)
    zeros = jnp.zeros_like(w_t)
    w_bd = jnp.concatenate(
        [jnp.concatenate([w_t, zeros], axis=1),
         jnp.concatenate([zeros, w_t], axis=1)], axis=0)   # (2K, 256)
    b2 = jnp.concatenate([bias, bias]).reshape(1, N2).astype(jnp.float32)

    grid = (b_pad // tile_b,)
    out = pl.pallas_call(
        _cos_sim_kernel,
        out_shape=jax.ShapeDtypeStruct((b_pad, 1), jnp.float32),
        grid=grid,
        in_specs=[
            pl.BlockSpec((tile_b, K2), lambda i: (i, 0)),       # x tile (pipelined)
            pl.BlockSpec((K2, N2), lambda i: (0, 0)),           # weight, resident
            pl.BlockSpec((1, N2), lambda i: (0, 0)),            # bias, resident
        ],
        out_specs=pl.BlockSpec((tile_b, 1), lambda i: (i, 0)),
        compiler_params=pltpu.CompilerParams(
            dimension_semantics=("parallel",)),                  # shard over 2 TCs on v7x
    )(x2, w_bd, b2)
    return out[:B, 0]  # (B,)


def _reference(x, weight, bias):
    B, S, D = x.shape
    half = SHOT_NUM // 2
    v1 = x[:, :half, :].reshape(B, -1) @ weight.T + bias
    v2 = x[:, half:, :].reshape(B, -1) @ weight.T + bias
    num = jnp.sum(v1 * v2, axis=1)
    n1 = jnp.maximum(jnp.linalg.norm(v1, axis=1), _EPS)
    n2 = jnp.maximum(jnp.linalg.norm(v2, axis=1), _EPS)
    return num / (n1 * n2)


if __name__ == "__main__":
    key = jax.random.PRNGKey(0)
    S, D = SHOT_NUM, 32
    K = (SHOT_NUM // 2) * D

    kx, kw, kb, kx2 = jax.random.split(key, 4)
    # Deterministic nn.Linear-style init: U(-1/sqrt(fan_in), 1/sqrt(fan_in))
    bound = 1.0 / (K ** 0.5)
    weight = jax.random.uniform(kw, (SIM_CHANNEL, K), jnp.float32, -bound, bound)
    bias = jax.random.uniform(kb, (SIM_CHANNEL,), jnp.float32, -bound, bound)

    # Small case (single grid step).
    B = 2
    x = jax.random.normal(kx, (B, S, D), dtype=jnp.float32)
    out = jax.block_until_ready(cos_sim_block(x, weight, bias))
    ref = _reference(x, weight, bias)
    assert out.shape == (B,)
    assert jnp.allclose(out, ref, atol=1e-5, rtol=1e-5), (out, ref)

    # Larger case exercising the batch grid (grid > 1) and tail padding.
    B_big = 2053
    x_big = jax.random.normal(kx2, (B_big, S, D), dtype=jnp.float32)
    out_big = jax.block_until_ready(cos_sim_block(x_big, weight, bias))
    ref_big = _reference(x_big, weight, bias)
    assert out_big.shape == (B_big,)
    assert jnp.allclose(out_big, ref_big, atol=1e-4, rtol=1e-5)

    print("KERNEL_OK")
</pallas_src>

<mosaic_0001>
module attributes {stable_mosaic.version = 11 : i64} {
  func.func @_cos_sim_kernel(%arg0: i32, %arg1: memref<8x256xf32, #tpu.memory_space<vmem>>, %arg2: memref<256x256xf32, #tpu.memory_space<vmem>>, %arg3: memref<1x256xf32, #tpu.memory_space<vmem>>, %arg4: memref<8x1xf32, #tpu.memory_space<vmem>>) attributes {dimension_semantics = [#tpu.dimension_semantics<parallel>], iteration_bounds = array<i64: 1>, scalar_prefetch = 0 : i64, scratch_operands = 0 : i64, tpu.core_type = #tpu.core_type<tc>, window_params = [{transform_indices = @transform_0, window_bounds = array<i64: 8, 256>}, {pipeline_mode = #tpu.pipeline_mode<synchronous>, transform_indices = @transform_1, window_bounds = array<i64: 256, 256>}, {pipeline_mode = #tpu.pipeline_mode<synchronous>, transform_indices = @transform_2, window_bounds = array<i64: 1, 256>}, {transform_indices = @transform_3, window_bounds = array<i64: 8, 1>}]} {
    %c0 = arith.constant 0 : index
    %c0_0 = arith.constant 0 : index
    %0 = vector.load %arg1[%c0, %c0_0] : memref<8x256xf32, #tpu.memory_space<vmem>>, vector<8x256xf32>
    %c0_1 = arith.constant 0 : index
    %c0_2 = arith.constant 0 : index
    %1 = vector.load %arg2[%c0_1, %c0_2] : memref<256x256xf32, #tpu.memory_space<vmem>>, vector<256x256xf32>
    %cst = arith.constant dense<0.000000e+00> : vector<8x256xf32>
    %2 = tpu.matmul %0, %1, %cst {dimension_numbers = #tpu.dot_dimension_numbers<[1], [0], [0], [1], [0, 0, 1, 1], [], []>} : vector<8x256xf32>, vector<256x256xf32>, vector<8x256xf32> -> vector<8x256xf32>
    %c0_3 = arith.constant 0 : index
    %c0_4 = arith.constant 0 : index
    %3 = vector.load %arg3[%c0_3, %c0_4] : memref<1x256xf32, #tpu.memory_space<vmem>>, vector<1x256xf32>
    %4 = vector.broadcast %3 : vector<1x256xf32> to vector<8x256xf32>
    %5 = arith.addf %2, %4 : vector<8x256xf32>
    %6 = vector.extract_strided_slice %5 {offsets = [0, 0], sizes = [8, 128], strides = [1, 1]} : vector<8x256xf32> to vector<8x128xf32>
    %7 = vector.extract_strided_slice %5 {offsets = [0, 128], sizes = [8, 128], strides = [1, 1]} : vector<8x256xf32> to vector<8x128xf32>
    %8 = arith.mulf %6, %7 : vector<8x128xf32>
    %cst_5 = arith.constant dense<0.000000e+00> : vector<8xf32>
    %9 = vector.multi_reduction <add>, %8, %cst_5 [1] : vector<8x128xf32> to vector<8xf32>
    %10 = vector.shape_cast %9 : vector<8xf32> to vector<8x1xf32>
    %11 = arith.mulf %6, %6 : vector<8x128xf32>
    %cst_6 = arith.constant dense<0.000000e+00> : vector<8xf32>
    %12 = vector.multi_reduction <add>, %11, %cst_6 [1] : vector<8x128xf32> to vector<8xf32>
    %13 = vector.shape_cast %12 : vector<8xf32> to vector<8x1xf32>
    %14 = arith.mulf %7, %7 : vector<8x128xf32>
    %cst_7 = arith.constant dense<0.000000e+00> : vector<8xf32>
    %15 = vector.multi_reduction <add>, %14, %cst_7 [1] : vector<8x128xf32> to vector<8xf32>
    %16 = vector.shape_cast %15 : vector<8xf32> to vector<8x1xf32>
    %cst_8 = arith.constant 1.000000e-16 : f32
    %17 = vector.broadcast %cst_8 : f32 to vector<8x1xf32>
    %18 = arith.maximumf %13, %17 : vector<8x1xf32>
    %cst_9 = arith.constant 1.000000e-16 : f32
    %19 = vector.broadcast %cst_9 : f32 to vector<8x1xf32>
    %20 = arith.maximumf %16, %19 : vector<8x1xf32>
    %21 = arith.mulf %18, %20 : vector<8x1xf32>
    %22 = math.rsqrt %21 : vector<8x1xf32>
    %23 = arith.mulf %10, %22 : vector<8x1xf32>
    %c0_10 = arith.constant 0 : index
    %c0_11 = arith.constant 0 : index
    %24 = vector.load %arg4[%c0_10, %c0_11] : memref<8x1xf32, #tpu.memory_space<vmem>>, vector<8x1xf32>
    tpu.vector_store %arg4[%c0_10, %c0_11], %23 {strides = array<i32>} : memref<8x1xf32, #tpu.memory_space<vmem>>, vector<8x1xf32>,
    return
  }
  func.func @transform_0(%arg0: i32) -> (i32, i32) {
    %c0_i32 = arith.constant 0 : i32
    %c0_i32_0 = arith.constant 0 : i32
    return %arg0, %c0_i32 : i32, i32
  }
  func.func @transform_1(%arg0: i32) -> (i32, i32) {
    %c0_i32 = arith.constant 0 : i32
    %c0_i32_0 = arith.constant 0 : i32
    %c0_i32_1 = arith.constant 0 : i32
    return %c0_i32, %c0_i32_0 : i32, i32
  }
  func.func @transform_2(%arg0: i32) -> (i32, i32) {
    %c0_i32 = arith.constant 0 : i32
    %c0_i32_0 = arith.constant 0 : i32
    %c0_i32_1 = arith.constant 0 : i32
    return %c0_i32, %c0_i32_0 : i32, i32
  }
  func.func @transform_3(%arg0: i32) -> (i32, i32) {
    %c0_i32 = arith.constant 0 : i32
    %c0_i32_0 = arith.constant 0 : i32
    return %arg0, %c0_i32 : i32, i32
  }
}

</mosaic_0001>

<llo_original>
// kernel: tpu_custom_call.1
$region0: #{tpu_custom_call.1}
  #allocation0 [shape = 'u32[]', space=smem, size = 0x4, offset = 0x4, fixed_abs, tag = 'smem constant byte address 0x4 - core index']
  #allocation1 [shape = 'u32[144,128]{1,0:T(1,128)}', space=vmem, size = 0x12000, scoped, tag = 'internal scratch']
  %s0 = inlined_call_operand.hbm [shape: f32[8,256], index: 0, kind: input, shape index: {}]
  %s1 = inlined_call_operand.hbm [shape: f32[256,256], index: 1, kind: input, shape index: {}]
  %s2 = inlined_call_operand.vmem [shape: f32[1,256], index: 2, kind: input, shape index: {}]
  %s3 = inlined_call_operand.vmem [shape: f32[8,1], index: 3, kind: output, shape index: {}]
  %s4 = sld [smem:[#allocation0]]
  $region30: #{tpu_custom_call.1} parent=0
    _
  %s6 = ssub.s32 1, %s4
  %s7 = scalar_select 0, %s6, %s4
  $region1: #{tpu_custom_call.1} parent=0
    #allocation2 [shape = 'u8[8192]{0}', space=vmem, size = 0x2000, scoped, tag = 'input window, operand 0, single buffered']
    #allocation3 [shape = 's32[1]{0}', space=sflag, size = 0x4, scoped, tag = 'scoped memory for tpu_custom_call.1']
    #allocation4 [shape = 'u8[262144]{0}', space=vmem, size = 0x40000, scoped, tag = 'input window, operand 1, single buffered']
    #allocation5 [shape = 's32[1]{0}', space=sflag, size = 0x4, scoped, tag = 'scoped memory for tpu_custom_call.1']
    %8 = vsyncpa [#allocation3], 0
    %9 = vsyncpa [#allocation5], 0
    // Predicated region
    $region2: #{tpu_custom_call.1} parent=1 // pred_check
      _
    $region3: #{tpu_custom_call.1} parent=1 // pred_check_branch
      %11 = sbr.rel (0) target = $region5
    $region4: #{tpu_custom_call.1} parent=1 // pred_region
      %s13 = ssub.s32 256, 256
      %14 = vsyncadd [#allocation3], %s13
      %s16 = sshll.u32 [#allocation2], 4
      %s17 = int_to_ptr.vmem [resolvable:$true] %s16
      %19 = dma.hbm_to_vmem [thread:$0]  %s0, 256, %s17, [#allocation3]
    $region5: #{tpu_custom_call.1} parent=1 // pred_fallthru
      _
    // Predicated region
    $region6: #{tpu_custom_call.1} parent=1 // pred_check
      _
    $region7: #{tpu_custom_call.1} parent=1 // pred_check_branch
      %21 = sbr.rel (0) target = $region9
    $region8: #{tpu_custom_call.1} parent=1 // pred_region
      %s23 = ssub.s32 8192, 8192
      %24 = vsyncadd [#allocation5], %s23
      %s25 = sshll.u32 [#allocation4], 4
      %s26 = int_to_ptr.vmem [resolvable:$true] %s25
      %31 = dma.hbm_to_vmem [thread:$0]  %s1, 8192, %s26, [#allocation5], 256, 256, 16
    $region9: #{tpu_custom_call.1} parent=1 // pred_fallthru
      _
    // Predicated region
    $region10: #{tpu_custom_call.1} parent=1 // pred_check
      _
    $region11: #{tpu_custom_call.1} parent=1 // pred_check_branch
      %33 = sbr.rel (0) target = $region13
    $region12: #{tpu_custom_call.1} parent=1 // pred_region
      _
    $region13: #{tpu_custom_call.1} parent=1 // pred_fallthru
      _
    // Predicated region
    $region14: #{tpu_custom_call.1} parent=1 // pred_check
      _
    $region15: #{tpu_custom_call.1} parent=1 // pred_check_branch
      %35 = sbr.rel (0) target = $region17
    $region16: #{tpu_custom_call.1} parent=1 // pred_region
      %36 = dma.done [#allocation3], 256
    $region17: #{tpu_custom_call.1} parent=1 // pred_fallthru
      _
    // Predicated region
    $region18: #{tpu_custom_call.1} parent=1 // pred_check
      _
    $region19: #{tpu_custom_call.1} parent=1 // pred_check_branch
      %38 = sbr.rel (0) target = $region21
    $region20: #{tpu_custom_call.1} parent=1 // pred_region
      %39 = dma.done [#allocation5], 8192
    $region21: #{tpu_custom_call.1} parent=1 // pred_fallthru
      _
    %v40 = vld [vmem:[#allocation2] sm:$0xff]
    %v41 = vld [vmem:[#allocation2 + $0x8] sm:$0xff]
    %v42 = vld [vmem:[#allocation4] sm:$0xff]
    %v43 = vld [vmem:[#allocation4 + $0x8] sm:$0xff]
    %v44 = vld [vmem:[#allocation4 + $0x10] sm:$0xff]
    %v45 = vld [vmem:[#allocation4 + $0x18] sm:$0xff]
    %v46 = vld [vmem:[#allocation4 + $0x20] sm:$0xff]
    %v47 = vld [vmem:[#allocation4 + $0x28] sm:$0xff]
    %v48 = vld [vmem:[#allocation4 + $0x30] sm:$0xff]
    %v49 = vld [vmem:[#allocation4 + $0x38] sm:$0xff]
    %v50 = vld [vmem:[#allocation4 + $0x40] sm:$0xff]
    %v51 = vld [vmem:[#allocation4 + $0x48] sm:$0xff]
    %v52 = vld [vmem:[#allocation4 + $0x50] sm:$0xff]
    %v53 = vld [vmem:[#allocation4 + $0x58] sm:$0xff]
    %v54 = vld [vmem:[#allocation4 + $0x60] sm:$0xff]
    %v55 = vld [vmem:[#allocation4 + $0x68] sm:$0xff]
    %v56 = vld [vmem:[#allocation4 + $0x70] sm:$0xff]
    %v57 = vld [vmem:[#allocation4 + $0x78] sm:$0xff]
    %v58 = vld [vmem:[#allocation4 + $0x80] sm:$0xff]
    %v59 = vld [vmem:[#allocation4 + $0x88] sm:$0xff]
    %v60 = vld [vmem:[#allocation4 + $0x90] sm:$0xff]
    %v61 = vld [vmem:[#allocation4 + $0x98] sm:$0xff]
    %v62 = vld [vmem:[#allocation4 + $0xa0] sm:$0xff]
    %v63 = vld [vmem:[#allocation4 + $0xa8] sm:$0xff]
    %v64 = vld [vmem:[#allocation4 + $0xb0] sm:$0xff]
    %v65 = vld [vmem:[#allocation4 + $0xb8] sm:$0xff]
    %v66 = vld [vmem:[#allocation4 + $0xc0] sm:$0xff]
    %v67 = vld [vmem:[#allocation4 + $0xc8] sm:$0xff]
    %v68 = vld [vmem:[#allocation4 + $0xd0] sm:$0xff]
    %v69 = vld [vmem:[#allocation4 + $0xd8] sm:$0xff]
    %v70 = vld [vmem:[#allocation4 + $0xe0] sm:$0xff]
    %v71 = vld [vmem:[#allocation4 + $0xe8] sm:$0xff]
    %v72 = vld [vmem:[#allocation4 + $0xf0] sm:$0xff]
    %v73 = vld [vmem:[#allocation4 + $0xf8] sm:$0xff]
    %v74 = vld [vmem:[#allocation4 + $0x100] sm:$0xff]
    %v75 = vld [vmem:[#allocation4 + $0x108] sm:$0xff]
    %v76 = vld [vmem:[#allocation4 + $0x110] sm:$0xff]
    %v77 = vld [vmem:[#allocation4 + $0x118] sm:$0xff]
    %v78 = vld [vmem:[#allocation4 + $0x120] sm:$0xff]
    %v79 = vld [vmem:[#allocation4 + $0x128] sm:$0xff]
    %v80 = vld [vmem:[#allocation4 + $0x130] sm:$0xff]
    %v81 = vld [vmem:[#allocation4 + $0x138] sm:$0xff]
    %v82 = vld [vmem:[#allocation4 + $0x140] sm:$0xff]
    %v83 = vld [vmem:[#allocation4 + $0x148] sm:$0xff]
    %v84 = vld [vmem:[#allocation4 + $0x150] sm:$0xff]
    %v85 = vld [vmem:[#allocation4 + $0x158] sm:$0xff]
    %v86 = vld [vmem:[#allocation4 + $0x160] sm:$0xff]
    %v87 = vld [vmem:[#allocation4 + $0x168] sm:$0xff]
    %v88 = vld [vmem:[#allocation4 + $0x170] sm:$0xff]
    %v89 = vld [vmem:[#allocation4 + $0x178] sm:$0xff]
    %v90 = vld [vmem:[#allocation4 + $0x180] sm:$0xff]
    %v91 = vld [vmem:[#allocation4 + $0x188] sm:$0xff]
    %v92 = vld [vmem:[#allocation4 + $0x190] sm:$0xff]
    %v93 = vld [vmem:[#allocation4 + $0x198] sm:$0xff]
    %v94 = vld [vmem:[#allocation4 + $0x1a0] sm:$0xff]
    %v95 = vld [vmem:[#allocation4 + $0x1a8] sm:$0xff]
    %v96 = vld [vmem:[#allocation4 + $0x1b0] sm:$0xff]
    %v97 = vld [vmem:[#allocation4 + $0x1b8] sm:$0xff]
    %v98 = vld [vmem:[#allocation4 + $0x1c0] sm:$0xff]
    %v99 = vld [vmem:[#allocation4 + $0x1c8] sm:$0xff]
    %v100 = vld [vmem:[#allocation4 + $0x1d0] sm:$0xff]
    %v101 = vld [vmem:[#allocation4 + $0x1d8] sm:$0xff]
    %v102 = vld [vmem:[#allocation4 + $0x1e0] sm:$0xff]
    %v103 = vld [vmem:[#allocation4 + $0x1e8] sm:$0xff]
    %v104 = vld [vmem:[#allocation4 + $0x1f0] sm:$0xff]
    %v105 = vld [vmem:[#allocation4 + $0x1f8] sm:$0xff]
    %v106 = vld [vmem:[%s2] sm:$0x3]
    %v108 = vlaneseq
    %v109 = vshrl.u32 %v108, 7
    %v110 = vsub.s32 0, %v109
    %v111 = vrot.slane %v106, %v110
    %v112 = vlaneseq
    %v113 = vshrl.u32 %v112, 7
    %v114 = vsub.s32 1, %v113
    %v115 = vrot.slane %v106, %v114
    %118 = vmatprep.subr.mxu0 %v43
    %119 = vmatpush1.msra.mxu0 %v42
    %120 = vmatprep.subr.mxu0 %v45
    %121 = vmatpush1.msra.mxu0 %v44
    %122 = vmatprep.subr.mxu0 %v47
    %123 = vmatpush1.msra.mxu0 %v46
    %124 = vmatprep.subr.mxu0 %v49
    %125 = vmatpush1.msra.mxu0 %v48
    %126 = vmatprep.subr.mxu0 %v51
    %127 = vmatpush1.msra.mxu0 %v50
    %128 = vmatprep.subr.mxu0 %v53
    %129 = vmatpush1.msra.mxu0 %v52
    %130 = vmatprep.subr.mxu0 %v55
    %131 = vmatpush1.msra.mxu0 %v54
    %132 = vmatprep.subr.mxu0 %v57
    %133 = vmatpush1.msra.mxu0 %v56
    %134 = vmatprep.subr.mxu0 %v59
    %135 = vmatpush1.msra.mxu0 %v58
    %136 = vmatprep.subr.mxu0 %v61
    %137 = vmatpush1.msra.mxu0 %v60
    %138 = vmatprep.subr.mxu0 %v63
    %139 = vmatpush1.msra.mxu0 %v62
    %140 = vmatprep.subr.mxu0 %v65
    %141 = vmatpush1.msra.mxu0 %v64
    %142 = vmatprep.subr.mxu0 %v67
    %143 = vmatpush1.msra.mxu0 %v66
    %144 = vmatprep.subr.mxu0 %v69
    %145 = vmatpush1.msra.mxu0 %v68
    %146 = vmatprep.subr.mxu0 %v71
    %147 = vmatpush1.msra.mxu0 %v70
    %148 = vmatprep.subr.mxu0 %v73
    %149 = vmatpush1.msra.mxu0 %v72
    %150 = vmatprep.subr.mxu0 %v75
    %151 = vmatpush1.msra.mxu0 %v74
    %152 = vmatprep.subr.mxu0 %v77
    %153 = vmatpush1.msra.mxu0 %v76
    %154 = vmatprep.subr.mxu0 %v79
    %155 = vmatpush1.msra.mxu0 %v78
    %156 = vmatprep.subr.mxu0 %v81
    %157 = vmatpush1.msra.mxu0 %v80
    %158 = vmatprep.subr.mxu0 %v83
    %159 = vmatpush1.msra.mxu0 %v82
    %160 = vmatprep.subr.mxu0 %v85
    %161 = vmatpush1.msra.mxu0 %v84
    %162 = vmatprep.subr.mxu0 %v87
    %163 = vmatpush1.msra.mxu0 %v86
    %164 = vmatprep.subr.mxu0 %v89
    %165 = vmatpush1.msra.mxu0 %v88
    %166 = vmatprep.subr.mxu0 %v91
    %167 = vmatpush1.msra.mxu0 %v90
    %168 = vmatprep.subr.mxu0 %v93
    %169 = vmatpush1.msra.mxu0 %v92
    %170 = vmatprep.subr.mxu0 %v95
    %171 = vmatpush1.msra.mxu0 %v94
    %172 = vmatprep.subr.mxu0 %v97
    %173 = vmatpush1.msra.mxu0 %v96
    %174 = vmatprep.subr.mxu0 %v99
    %175 = vmatpush1.msra.mxu0 %v98
    %176 = vmatprep.subr.mxu0 %v101
    %177 = vmatpush1.msra.mxu0 %v100
    %178 = vmatprep.subr.mxu0 %v103
    %179 = vmatpush1.msra.mxu0 %v102
    %180 = vmatprep.subr.mxu0 %v105
    %181 = vmatpush1.msra.mxu0 %v104
    %182 = vmatprep.mubr.f32.mxu0 %v41
    %183 = vmatmul.mubr.f32.gmra.mrb[0].mxu0 %v40
    %v184 = vpop.f32.mrb[0].mxu0
    %v185 = vadd.f32 %v111, %v184
    %v186 = vpop.f32.mrb[0].mxu0
    %v187 = vadd.f32 %v115, %v186
    %188 = vdwg.mxu0
    %v189 = vmul.f32 %v185, %v187
    %190 = vadd.xlane.f32.xlu0 %v189
    %v191 = vpop.xlane.xlu0 %190
    %v192 = vmul.f32 %v185, %v185
    %193 = vadd.xlane.f32.xlu0 %v192
    %v194 = vpop.xlane.xlu0 %193
    %v195 = vmul.f32 %v187, %v187
    %196 = vadd.xlane.f32.xlu0 %v195
    %v197 = vpop.xlane.xlu0 %196
    %v198 = vmax.f32 %v194, 1e-16
    %v199 = vmax.f32 %v197, 1e-16
    %v200 = vmul.f32 %v198, %v199
    %v201 = vrsqrt.pop %v200
    %v202 = vmul.f32 %v191, %v201
    %vm203 = vcmask 7168
    %204 = vst.msk [vmem:[%s3] sm:$0xff] %vm203, %v202
    // Predicated region
    $region22: #{tpu_custom_call.1} parent=1 // pred_check
      _
    $region23: #{tpu_custom_call.1} parent=1 // pred_check_branch
      %206 = sbr.rel (0) target = $region25
    $region24: #{tpu_custom_call.1} parent=1 // pred_region
      _
    $region25: #{tpu_custom_call.1} parent=1 // pred_fallthru
      _
    // Predicated region
    $region26: #{tpu_custom_call.1} parent=1 // pred_check
      _
    $region27: #{tpu_custom_call.1} parent=1 // pred_check_branch
      %208 = sbr.rel (0) target = $region29
    $region28: #{tpu_custom_call.1} parent=1 // pred_region
      _
    $region29: #{tpu_custom_call.1} parent=1 // pred_fallthru
      _
    %209 = vsyncpa [#allocation3], 1
    %210 = vsyncpa [#allocation5], 1

</llo_original>
